<compile_context>
chip_gen: v5e
topology: v5e:2x2
jax: 0.10.0
libtpu: 0.0.40
codegen_flags: <defaults>
</compile_context>

<pallas_src>
import functools

import jax
import jax.numpy as jnp
from jax.experimental import pallas as pl
from jax.experimental.pallas import tpu as pltpu


def _round_up(x, m):
    return ((x + m - 1) // m) * m


def _choose_tile(S, C_in, C_out, N, itemsize):
    """Pick the spatial tile (columns) for the (C, ts) blocks.

    Targets ~2 MiB of HBM traffic per grid step, bounded by a conservative
    12 MiB VMEM budget (double-buffered in/out + f32 acc + cast temps), and
    keeps >= 2 total parallel grid steps when possible (v7x megacore).
    All arithmetic is on static Python ints (shapes), so it happens at trace
    time.
    """
    # --- bandwidth target: ~2 MiB of in+out traffic per grid step ---------
    target_bytes = 2 * 1024 * 1024
    bytes_per_col = itemsize * (C_in + C_out)
    ts = max(128, target_bytes // bytes_per_col)

    # --- VMEM budget (per grid step) --------------------------------------
    #   input  double buffer : 2 * C_in  * ts * itemsize
    #   output double buffer : 2 * C_out * ts * itemsize
    #   f32 accumulator + bias-add / cast temporaries : ~2 * C_out * ts * 4
    #   (+ small slack for an f32 upcast of the input tile)
    vmem_budget = 12 * 1024 * 1024
    per_col = (2 * (C_in + C_out) * itemsize   # pipelined buffers
               + 2 * C_out * 4                  # f32 acc + cast temp
               + C_in * 4)                      # possible f32 upcast of x tile
    ts = min(ts, vmem_budget // per_col)

    # --- align & clamp to the (128-rounded) spatial extent ----------------
    ts = max(128, (ts // 128) * 128)
    ts = min(ts, _round_up(S, 128))

    # --- keep >= 2 total parallel steps for v7x's two TensorCores ---------
    if N * ((S + ts - 1) // ts) < 2 and S > 128:
        half = _round_up((S + 1) // 2, 128)
        ts = max(128, min(ts, half))

    return ts


def _outconv_kernel(x_ref, w_ref, b_ref, o_ref):
    # x_ref: (1, C_in, ts)   -- spatial tile on lanes
    # w_ref: (C_out, C_in)   -- resident across the grid
    # b_ref: (C_out, 1)
    # o_ref: (1, C_out, ts)
    x = x_ref[0]                                                 # (C_in, ts)
    w = w_ref[...]                                               # (C_out, C_in)
    acc = jnp.dot(w, x, preferred_element_type=jnp.float32)      # (C_out, ts) f32
    acc = acc + b_ref[...].astype(jnp.float32)                   # broadcast (C_out, 1)
    o_ref[0] = acc.astype(o_ref.dtype)


@jax.jit
def outconv_forward(x, weight, bias):
    """1x1x1 Conv3d forward.

    Args:
      x:      (N, C_in, D, H, W)  -- NCDHW, like PyTorch (must be contiguous).
      weight: (C_out, C_in)       -- Conv3d weight squeezed of its 1x1x1 taps.
      bias:   (C_out,)
    Returns:
      (N, C_out, D, H, W)
    """
    N, C_in, D, H, W = x.shape
    C_out = weight.shape[0]
    S = D * H * W
    itemsize = jnp.dtype(x.dtype).itemsize

    # Free reshape (NCDHW is contiguous with spatial last): no transpose pass.
    x3 = x.reshape(N, C_in, S)
    b2d = bias.reshape(C_out, 1)

    ts = _choose_tile(S, C_in, C_out, N, itemsize)
    grid_s = pl.cdiv(S, ts)

    cost = pl.CostEstimate(
        flops=2 * N * S * C_in * C_out,
        transcendentals=0,
        bytes_accessed=(N * S * itemsize * (C_in + C_out)
                        + C_out * C_in * weight.dtype.itemsize
                        + C_out * bias.dtype.itemsize),
    )

    out3 = pl.pallas_call(
        _outconv_kernel,
        out_shape=jax.ShapeDtypeStruct((N, C_out, S), x.dtype),
        grid_spec=pltpu.PrefetchScalarGridSpec(
            num_scalar_prefetch=0,
            grid=(N, grid_s),
            in_specs=[
                pl.BlockSpec((1, C_in, ts), lambda n, s: (n, 0, s)),
                pl.BlockSpec((C_out, C_in), lambda n, s: (0, 0)),
                pl.BlockSpec((C_out, 1), lambda n, s: (0, 0)),
            ],
            out_specs=pl.BlockSpec((1, C_out, ts), lambda n, s: (n, 0, s)),
        ),
        compiler_params=pltpu.CompilerParams(
            dimension_semantics=("parallel", "parallel")),
        cost_estimate=cost,
    )(x3, weight, b2d)

    return out3.reshape(N, C_out, D, H, W)


if __name__ == "__main__":
    # Small shapes consistent with a 3D segmentation head.
    N, C_in, C_out = 2, 4, 3
    D, H, W = 4, 8, 8

    key = jax.random.PRNGKey(0)
    kx, kw, kb = jax.random.split(key, 3)

    x = jax.random.normal(kx, (N, C_in, D, H, W), dtype=jnp.float32)
    # Conv3d weight shape is (C_out, C_in, 1, 1, 1); we keep the squeezed
    # (C_out, C_in) form.
    weight = jax.random.normal(kw, (C_out, C_in), dtype=jnp.float32) * 0.1
    bias = jax.random.normal(kb, (C_out,), dtype=jnp.float32) * 0.1

    out = outconv_forward(x, weight, bias)
    jax.block_until_ready(out)

    # Reference check in plain JAX (same semantics as the PyTorch module).
    ref = jnp.einsum("ncdhw,oc->nodhw", x, weight) + bias[None, :, None, None, None]
    assert out.shape == (N, C_out, D, H, W)
    assert jnp.allclose(out, ref, atol=1e-5, rtol=1e-5)

    print("KERNEL_OK")
</pallas_src>

<mosaic_0001>
module attributes {stable_mosaic.version = 11 : i64} {
  func.func @_outconv_kernel(%arg0: i32, %arg1: i32, %arg2: memref<1x4x256xf32, #tpu.memory_space<vmem>>, %arg3: memref<3x4xf32, #tpu.memory_space<vmem>>, %arg4: memref<3x1xf32, #tpu.memory_space<vmem>>, %arg5: memref<1x3x256xf32, #tpu.memory_space<vmem>>) attributes {dimension_semantics = [#tpu.dimension_semantics<parallel>, #tpu.dimension_semantics<parallel>], iteration_bounds = array<i64: 2, 1>, scalar_prefetch = 0 : i64, scratch_operands = 0 : i64, tpu.core_type = #tpu.core_type<tc>, window_params = [{transform_indices = @transform_0, window_bounds = array<i64: 1, 4, 256>}, {pipeline_mode = #tpu.pipeline_mode<synchronous>, transform_indices = @transform_1, window_bounds = array<i64: 3, 4>}, {pipeline_mode = #tpu.pipeline_mode<synchronous>, transform_indices = @transform_2, window_bounds = array<i64: 3, 1>}, {transform_indices = @transform_3, window_bounds = array<i64: 1, 3, 256>}]} {
    %c0 = arith.constant 0 : index
    %c0_0 = arith.constant 0 : index
    %c0_1 = arith.constant 0 : index
    %0 = vector.load %arg2[%c0, %c0_0, %c0_1] : memref<1x4x256xf32, #tpu.memory_space<vmem>>, vector<1x4x256xf32>
    %1 = vector.shape_cast %0 : vector<1x4x256xf32> to vector<4x256xf32>
    %c0_2 = arith.constant 0 : index
    %c0_3 = arith.constant 0 : index
    %2 = vector.load %arg3[%c0_2, %c0_3] : memref<3x4xf32, #tpu.memory_space<vmem>>, vector<3x4xf32>
    %cst = arith.constant dense<0.000000e+00> : vector<3x256xf32>
    %3 = tpu.matmul %2, %1, %cst {dimension_numbers = #tpu.dot_dimension_numbers<[1], [0], [0], [1], [0, 0, 1, 1], [], []>} : vector<3x4xf32>, vector<4x256xf32>, vector<3x256xf32> -> vector<3x256xf32>
    %c0_4 = arith.constant 0 : index
    %c0_5 = arith.constant 0 : index
    %4 = vector.load %arg4[%c0_4, %c0_5] : memref<3x1xf32, #tpu.memory_space<vmem>>, vector<3x1xf32>
    %5 = vector.broadcast %4 : vector<3x1xf32> to vector<3x256xf32>
    %6 = arith.addf %3, %5 : vector<3x256xf32>
    %c0_6 = arith.constant 0 : index
    %c0_7 = arith.constant 0 : index
    %c0_8 = arith.constant 0 : index
    %7 = vector.load %arg5[%c0_6, %c0_7, %c0_8] : memref<1x3x256xf32, #tpu.memory_space<vmem>>, vector<1x3x256xf32>
    %8 = vector.shape_cast %7 : vector<1x3x256xf32> to vector<3x256xf32>
    %9 = vector.shape_cast %6 : vector<3x256xf32> to vector<1x3x256xf32>
    tpu.vector_store %arg5[%c0_6, %c0_7, %c0_8], %9 {strides = array<i32>} : memref<1x3x256xf32, #tpu.memory_space<vmem>>, vector<1x3x256xf32>,
    return
  }
  func.func @transform_0(%arg0: i32, %arg1: i32) -> (i32, i32, i32) {
    %c0_i32 = arith.constant 0 : i32
    %c0_i32_0 = arith.constant 0 : i32
    return %arg0, %c0_i32, %arg1 : i32, i32, i32
  }
  func.func @transform_1(%arg0: i32, %arg1: i32) -> (i32, i32) {
    %c0_i32 = arith.constant 0 : i32
    %c0_i32_0 = arith.constant 0 : i32
    %c0_i32_1 = arith.constant 0 : i32
    return %c0_i32, %c0_i32_0 : i32, i32
  }
  func.func @transform_2(%arg0: i32, %arg1: i32) -> (i32, i32) {
    %c0_i32 = arith.constant 0 : i32
    %c0_i32_0 = arith.constant 0 : i32
    %c0_i32_1 = arith.constant 0 : i32
    return %c0_i32, %c0_i32_0 : i32, i32
  }
  func.func @transform_3(%arg0: i32, %arg1: i32) -> (i32, i32, i32) {
    %c0_i32 = arith.constant 0 : i32
    %c0_i32_0 = arith.constant 0 : i32
    return %arg0, %c0_i32, %arg1 : i32, i32, i32
  }
}

</mosaic_0001>

<llo_original>
// kernel: outconv_forward.1
$region0: #{outconv_forward.1}
  #allocation0 [shape = 'u32[]', space=smem, size = 0x4, offset = 0x4, fixed_abs, tag = 'smem constant byte address 0x4 - core index']
  #allocation1 [shape = 'u32[72,128]{1,0:T(1,128)}', space=vmem, size = 0x9000, scoped, tag = 'internal scratch']
  %s0 = inlined_call_operand.vmem [shape: f32[2,4,256], index: 0, kind: input, shape index: {}]
  %s1 = inlined_call_operand.vmem [shape: f32[3,4], index: 1, kind: input, shape index: {}]
  %s2 = inlined_call_operand.vmem [shape: f32[3,1], index: 2, kind: input, shape index: {}]
  %s3 = inlined_call_operand.vmem [shape: f32[2,3,256], index: 3, kind: output, shape index: {}]
  %s4 = sld [smem:[#allocation0]]
  $region45: #{outconv_forward.1} parent=0
    _
  %s6 = ssub.s32 1, %s4
  %s7 = scalar_select 0, %s6, %s4
  loop: start=0, step=1, limit=4
  $region2: #{outconv_forward.1} parent=0 // loop_pre_header
    _
  $region3: #{outconv_forward.1} parent=0 // loop_header
    %s9 = sphi 0, %s13
    %p10 = scmp.ge.s32.totalorder %s9, 4
    %s16 = sphi 0, %s28
    %s17 = sphi 0, %s24
    %s18 = sphi 0, %s16
    %s19 = sphi 0, %s17
    %s20 = sphi 0, %s18
    %s21 = sphi 0, %s19
    %s33 = sphi 0, %s35
    %s36 = sphi 0, %s33
    %s37 = sphi 0, %s36
    %s53 = sphi 0, %s37
    %s57 = sphi 0, %s57
    %s59 = sphi 0, %s57
    %s60 = sphi 0, %s59
    %s74 = sphi 0, %s60
    %s78 = sphi 0, %s78
    %s80 = sphi 0, %s78
    %s81 = sphi 0, %s80
    %s95 = sphi 0, %s81
    %s103 = sphi 0, %s105
    %s106 = sphi 0, %s103
    %s107 = sphi 0, %s106
    %s123 = sphi 0, %s107
  $region4: #{outconv_forward.1} parent=0 // loop_header_branch
    %12 = sbr.rel (%p10) target = $region8
  $region5: #{outconv_forward.1} parent=0 // loop_body
    %s14 = ssub.s32 %s9, 1
    %s15 = ssub.s32 %s9, 2
    %s22 = sadd.s32 1, %s17
    %p23 = scmp.ge.s32.totalorder %s22, 1
    %s24 = scalar_select %p23, 0, %s22
    %s25 = sadd.s32 1, %s16
    %s26 = scalar_select %p23, %s25, %s16
    %p27 = scmp.ge.s32.totalorder %s26, 2
    %s28 = scalar_select %p27, 0, %s26
    %s29 = ssub.s32 %s16, %s28
    %s30 = ssub.s32 %s17, %s24
    %s31 = sor.u32 %s29, %s30
    %p32 = scmp.eq.s32.totalorder %s31, 0
    %s34 = sadd.s32 %s33, 1
    %s35 = scalar_select %p32, %s33, %s34
    %p38 = pneg %p32
    %p39 = scmp.eq.s32.totalorder %s9, 1
    %p40 = por %p38, %p39
    %p41 = scmp.ne.s32.totalorder %s33, %s36
    %p42 = scmp.eq.s32.totalorder %s9, 0
    %p43 = por %p41, %p42
    %p44 = scmp.ne.s32.totalorder %s33, %s36
    %p45 = scmp.eq.s32.totalorder %s14, 1
    %p46 = por %p44, %p45
    %p47 = scmp.ne.s32.totalorder %s36, %s37
    %p48 = scmp.eq.s32.totalorder %s14, 0
    %p49 = por %p47, %p48
    %p50 = scmp.ne.s32.totalorder %s36, %s37
    %p51 = scmp.eq.s32.totalorder %s15, 1
    %p52 = por %p50, %p51
    %p54 = scmp.ne.s32.totalorder %s37, %s53
    %p55 = scmp.eq.s32.totalorder %s15, 0
    %p56 = por %p54, %p55
    %s58 = sadd.s32 %s57, 1
    %p61 = scmp.eq.s32.totalorder %s9, 1
    %p62 = scmp.ne.s32.totalorder %s57, %s59
    %p63 = scmp.eq.s32.totalorder %s9, 0
    %p64 = por %p62, %p63
    %p65 = scmp.ne.s32.totalorder %s57, %s59
    %p66 = scmp.eq.s32.totalorder %s14, 1
    %p67 = por %p65, %p66
    %p68 = scmp.ne.s32.totalorder %s59, %s60
    %p69 = scmp.eq.s32.totalorder %s14, 0
    %p70 = por %p68, %p69
    %p71 = scmp.ne.s32.totalorder %s59, %s60
    %p72 = scmp.eq.s32.totalorder %s15, 1
    %p73 = por %p71, %p72
    %p75 = scmp.ne.s32.totalorder %s60, %s74
    %p76 = scmp.eq.s32.totalorder %s15, 0
    %p77 = por %p75, %p76
    %s79 = sadd.s32 %s78, 1
    %p82 = scmp.eq.s32.totalorder %s9, 1
    %p83 = scmp.ne.s32.totalorder %s78, %s80
    %p84 = scmp.eq.s32.totalorder %s9, 0
    %p85 = por %p83, %p84
    %p86 = scmp.ne.s32.totalorder %s78, %s80
    %p87 = scmp.eq.s32.totalorder %s14, 1
    %p88 = por %p86, %p87
    %p89 = scmp.ne.s32.totalorder %s80, %s81
    %p90 = scmp.eq.s32.totalorder %s14, 0
    %p91 = por %p89, %p90
    %p92 = scmp.ne.s32.totalorder %s80, %s81
    %p93 = scmp.eq.s32.totalorder %s15, 1
    %p94 = por %p92, %p93
    %p96 = scmp.ne.s32.totalorder %s81, %s95
    %p97 = scmp.eq.s32.totalorder %s15, 0
    %p98 = por %p96, %p97
    %s99 = ssub.s32 %s16, %s28
    %s100 = ssub.s32 %s17, %s24
    %s101 = sor.u32 %s99, %s100
    %p102 = scmp.eq.s32.totalorder %s101, 0
    %s104 = sadd.s32 %s103, 1
    %s105 = scalar_select %p102, %s103, %s104
    %p108 = pneg %p102
    %p109 = scmp.eq.s32.totalorder %s9, 1
    %p110 = por %p108, %p109
    %p111 = scmp.ne.s32.totalorder %s103, %s106
    %p112 = scmp.eq.s32.totalorder %s9, 0
    %p113 = por %p111, %p112
    %p114 = scmp.ne.s32.totalorder %s103, %s106
    %p115 = scmp.eq.s32.totalorder %s14, 1
    %p116 = por %p114, %p115
    %p117 = scmp.ne.s32.totalorder %s106, %s107
    %p118 = scmp.eq.s32.totalorder %s14, 0
    %p119 = por %p117, %p118
    %p120 = scmp.ne.s32.totalorder %s106, %s107
    %p121 = scmp.eq.s32.totalorder %s15, 1
    %p122 = por %p120, %p121
    %p124 = scmp.ne.s32.totalorder %s107, %s123
    %p125 = scmp.eq.s32.totalorder %s15, 0
    %p126 = por %p124, %p125
    %p127 = scmp.le.s32.totalorder 1, %s9
    %p128 = scmp.lt.s32.totalorder %s9, 3
    %p129 = pnand %p127, %p128
    %p130 = pneg %p129
    // Predicated region
    $region9: #{outconv_forward.1} parent=5 // pred_check
      _
    $region10: #{outconv_forward.1} parent=5 // pred_check_branch
      %132 = sbr.rel (%p129) target = $region12
    $region11: #{outconv_forward.1} parent=5 // pred_region
      %s133 = ssub.s32 %s9, 1
      // Predicated region
      $region13: #{outconv_forward.1} parent=11 // pred_check
        %p134 = pneg %p70
      $region14: #{outconv_forward.1} parent=11 // pred_check_branch
        %136 = sbr.rel (%p134) target = $region16
      $region15: #{outconv_forward.1} parent=11 // pred_region
        _
      $region16: #{outconv_forward.1} parent=11 // pred_fallthru
        _
      // Predicated region
      $region17: #{outconv_forward.1} parent=11 // pred_check
        %p137 = pneg %p91
      $region18: #{outconv_forward.1} parent=11 // pred_check_branch
        %139 = sbr.rel (%p137) target = $region20
      $region19: #{outconv_forward.1} parent=11 // pred_region
        _
      $region20: #{outconv_forward.1} parent=11 // pred_fallthru
        _
    $region12: #{outconv_forward.1} parent=5 // pred_fallthru
      _
    %p140 = scmp.lt.s32.totalorder %s9, 2
    // Predicated region
    $region21: #{outconv_forward.1} parent=5 // pred_check
      %p141 = pneg %p140
    $region22: #{outconv_forward.1} parent=5 // pred_check_branch
      %143 = sbr.rel (%p141) target = $region24
    $region23: #{outconv_forward.1} parent=5 // pred_region
      // Predicated region
      $region25: #{outconv_forward.1} parent=23 // pred_check
        %p144 = pneg %p43
      $region26: #{outconv_forward.1} parent=23 // pred_check_branch
        %146 = sbr.rel (%p144) target = $region28
      $region27: #{outconv_forward.1} parent=23 // pred_region
        %s147 = smul.u32 2, %s17
        %p148 = scmp.lt.s32.totalorder %s16, 1
        %s149 = scalar_select %p148, %s16, 1
        %p150 = scmp.lt.s32.totalorder %s147, 1
        %s151 = scalar_select %p150, %s147, 1
        %s152 = smul.addr %s149, 2
        %s153 = sadd.s32 %s151, %s152
        %s154 = smul.addr %s153, 4
        %s155 = scalar_lea.vmem %s0, %s154
        %s156 = smul.u32 2, %s17
      $region28: #{outconv_forward.1} parent=23 // pred_fallthru
        _
    $region24: #{outconv_forward.1} parent=5 // pred_fallthru
      _
    %p157 = scmp.le.s32.totalorder 1, %s9
    %p158 = scmp.lt.s32.totalorder %s9, 3
    %p159 = pnand %p157, %p158
    %p160 = pneg %p159
    // Predicated region
    $region29: #{outconv_forward.1} parent=5 // pred_check
      _
    $region30: #{outconv_forward.1} parent=5 // pred_check_branch
      %162 = sbr.rel (%p159) target = $region32
    $region31: #{outconv_forward.1} parent=5 // pred_region
      %s163 = ssub.s32 %s9, 1
      %s164 = smul.u32 2, %s19
      %p165 = scmp.lt.s32.totalorder %s18, 1
      %s166 = scalar_select %p165, %s18, 1
      %p167 = scmp.lt.s32.totalorder %s164, 1
      %s168 = scalar_select %p167, %s164, 1
      %s169 = smul.addr %s166, 2
      %s170 = sadd.s32 %s168, %s169
      %s171 = smul.addr %s170, 4
      %s172 = scalar_lea.vmem %s0, %s171
      %p173 = pneg %p49
      %p174 = pneg %p46
      %p175 = pneg %p70
      %p176 = pneg %p67
      %p177 = pneg %p91
      %p178 = pneg %p88
      %p179 = pneg %p119
      %p180 = pneg %p116
      %s181 = smul.u32 2, %s19
      %p182 = scmp.lt.s32.totalorder %s18, 1
      %s183 = scalar_select %p182, %s18, 1
      %p184 = scmp.lt.s32.totalorder %s181, 1
      %s185 = scalar_select %p184, %s181, 1
      %s186 = smul.addr %s183, 2
      %s187 = sadd.s32 %s185, %s186
      %s188 = smul.addr %s187, 4
      %s189 = scalar_lea.vmem %s3, %s188
      %s190 = smul.u32 2, %s19
      %p191 = scmp.lt.s32.totalorder %s18, 1
      %s192 = scalar_select %p191, %s18, 1
      %p193 = scmp.lt.s32.totalorder %s190, 1
      %s194 = scalar_select %p193, %s190, 1
      %s195 = smul.addr %s192, 2
      %s196 = sadd.s32 %s194, %s195
      %s197 = smul.addr %s196, 4
      %s198 = scalar_lea.vmem %s0, %s197
      %s199 = smul.u32 2, %s19
      %s200 = smul.u32 2, %s19
      %p201 = scmp.lt.s32.totalorder %s18, 1
      %s202 = scalar_select %p201, %s18, 1
      %p203 = scmp.lt.s32.totalorder %s200, 1
      %s204 = scalar_select %p203, %s200, 1
      %s205 = smul.addr %s202, 2
      %s206 = sadd.s32 %s204, %s205
      %s207 = smul.addr %s206, 4
      %s208 = scalar_lea.vmem %s3, %s207
      %s209 = smul.u32 2, %s19
      %v210 = vld [vmem:[%s198] sm:$0xff]
      %v211 = vld [vmem:[%s1] sm:$0x7]
      %v212 = vld [vmem:[%s2] sm:$0x7]
      %214 = vset.pattern.permute.xlu0 0
      %215 = vperm.xlu0 %214, %v212
      %v216 = vpop.permute.xlu0 %215
      %219 = vst [vmem:[#allocation1] ss:$2 sm:$0xff] %v210
      %v220 = vld.sshfl [vmem:[#allocation1] sm:$0xff pattern:$0x75316420]
      %v221 = vld.sshfl [vmem:[#allocation1 + $0x8] sm:$0xff pattern:$0x75316420]
      %vm222 = vcmask 31744
      %v224 = vsel %vm222, %v211, 0
      %vm226 = vcmask 1043456
      %v227 = vsel %vm226, %v220, 0
      %v229 = vsel %vm226, %v221, 0
      %231 = vmatpush.msra.mxu0 0.0
      %232 = vmatpush.msra.mxu0 0.0
      %233 = vmatpush.msra.mxu0 0.0
      %234 = vmatpush.msra.mxu0 0.0
      %235 = vmatpush.msra.mxu0 0.0
      %236 = vmatpush.msra.mxu0 0.0
      %237 = vmatpush.msra.mxu0 0.0
      %238 = vmatpush.msra.mxu0 0.0
      %239 = vmatpush.msra.mxu0 0.0
      %240 = vmatpush.msra.mxu0 0.0
      %241 = vmatpush.msra.mxu0 0.0
      %242 = vmatpush.msra.mxu0 0.0
      %243 = vmatpush.msra.mxu0 0.0
      %244 = vmatpush.msra.mxu0 0.0
      %245 = vmatpush.msra.mxu0 0.0
      %246 = vmatpush.msra.mxu0 %v227
      %247 = vmatmul.f32.gmra.mxu0 %v224
      %v248 = vpop.f32.mrf.mxu0
      %v249 = vadd.f32 %v216, %v248
      %250 = vdwg.mxu0
      %251 = vmatpush.msra.mxu0 0.0
      %252 = vmatpush.msra.mxu0 0.0
      %253 = vmatpush.msra.mxu0 0.0
      %254 = vmatpush.msra.mxu0 0.0
      %255 = vmatpush.msra.mxu0 0.0
      %256 = vmatpush.msra.mxu0 0.0
      %257 = vmatpush.msra.mxu0 0.0
      %258 = vmatpush.msra.mxu0 0.0
      %259 = vmatpush.msra.mxu0 0.0
      %260 = vmatpush.msra.mxu0 0.0
      %261 = vmatpush.msra.mxu0 0.0
      %262 = vmatpush.msra.mxu0 0.0
      %263 = vmatpush.msra.mxu0 0.0
      %264 = vmatpush.msra.mxu0 0.0
      %265 = vmatpush.msra.mxu0 0.0
      %266 = vmatpush.msra.mxu0 %v229
      %267 = vmatmul.f32.gmra.mxu0 %v224
      %v268 = vpop.f32.mrf.mxu0
      %v269 = vadd.f32 %v216, %v268
      %270 = vdwg.mxu0
      %v273 = vrot.slane %v269, 4
      %v274 = vsel %vm226, %v249, %v273
      %276 = vst [vmem:[%s208] sm:$0x77] %v274
      %s277 = smul.u32 2, %s19
      %p278 = scmp.lt.s32.totalorder %s18, 1
      %s279 = scalar_select %p278, %s18, 1
      %p280 = scmp.lt.s32.totalorder %s277, 1
      %s281 = scalar_select %p280, %s277, 1
      %s282 = smul.addr %s279, 2
      %s283 = sadd.s32 %s281, %s282
      %s284 = smul.addr %s283, 4
      %s285 = scalar_lea.vmem %s3, %s284
      // Predicated region
      $region33: #{outconv_forward.1} parent=31 // pred_check
        %p286 = pneg %p116
      $region34: #{outconv_forward.1} parent=31 // pred_check_branch
        %288 = sbr.rel (%p286) target = $region36
      $region35: #{outconv_forward.1} parent=31 // pred_region
        %s289 = smul.u32 2, %s19
      $region36: #{outconv_forward.1} parent=31 // pred_fallthru
        _
    $region32: #{outconv_forward.1} parent=5 // pred_fallthru
      _
    %p290 = scmp.le.s32.totalorder 2, %s9
    // Predicated region
    $region37: #{outconv_forward.1} parent=5 // pred_check
      %p291 = pneg %p290
    $region38: #{outconv_forward.1} parent=5 // pred_check_branch
      %293 = sbr.rel (%p291) target = $region40
    $region39: #{outconv_forward.1} parent=5 // pred_region
      %s294 = ssub.s32 %s9, 2
      // Predicated region
      $region41: #{outconv_forward.1} parent=39 // pred_check
        %p295 = pneg %p122
      $region42: #{outconv_forward.1} parent=39 // pred_check_branch
        %297 = sbr.rel (%p295) target = $region44
      $region43: #{outconv_forward.1} parent=39 // pred_region
        %s298 = smul.u32 2, %s21
        %p299 = scmp.lt.s32.totalorder %s20, 1
        %s300 = scalar_select %p299, %s20, 1
        %p301 = scmp.lt.s32.totalorder %s298, 1
        %s302 = scalar_select %p301, %s298, 1
        %s303 = smul.addr %s300, 2
        %s304 = sadd.s32 %s302, %s303
        %s305 = smul.addr %s304, 4
        %s306 = scalar_lea.vmem %s3, %s305
      $region44: #{outconv_forward.1} parent=39 // pred_fallthru
        _
    $region40: #{outconv_forward.1} parent=5 // pred_fallthru
      _
  $region6: #{outconv_forward.1} parent=0 // loop_footer
    %s13 = sadd.s32 1, %s9
  $region7: #{outconv_forward.1} parent=0 // loop_footer_branch
    %8 = sbr.rel target = $region3
  $region8: #{outconv_forward.1} parent=0 // loop_exit
    _

</llo_original>
